<compile_context>
chip_gen: v5e
topology: v5e:2x2
jax: 0.10.0
libtpu: 0.0.40
codegen_flags: <defaults>
</compile_context>

<pallas_src>
import functools

import numpy as np
import jax
import jax.numpy as jnp
from jax import lax
from jax.experimental import pallas as pl
from jax.experimental.pallas import tpu as pltpu

GRAY_W = (0.299, 0.587, 0.114)


def _dog_kernel_np(size: int, var: float, var_delta: float) -> np.ndarray:
    """Difference-of-Gaussians kernel, built deterministically with numpy."""
    c = (size - 1) / 2.0
    coords = np.arange(size, dtype=np.float64) - c
    yy, xx = np.meshgrid(coords, coords, indexing="ij")

    def gauss(v):
        g = np.exp(-(yy ** 2 + xx ** 2) / (2.0 * v))
        return g / g.sum()

    return (gauss(var) - gauss(var + var_delta)).astype(np.float32)


def _tpu_vmem_info():
    """Best-effort trace-time hardware query: (VMEM bytes or None, TC/chip)."""
    vmem_bytes = None
    cores = 1
    try:
        info = pltpu.get_tpu_info()
        vmem_bytes = int(getattr(info, "vmem_capacity_bytes"))
        for name in ("num_tensorcores", "tensorcores_per_chip",
                     "num_cores_per_chip", "num_cores"):
            v = getattr(info, name, None)
            if isinstance(v, int) and v > 0:
                cores = v
                break
    except Exception:
        vmem_bytes = None
    return vmem_bytes, cores


def _pick_tiling(N, C, H, W, in_dtype, out_dtype):
    """Images per grid step, grid length, and vmem limit — generation-aware."""
    vmem_bytes, cores = _tpu_vmem_info()
    if vmem_bytes is None:
        budget = 8 << 20           # conservative fallback (fits every generation)
        vmem_limit = None
    else:
        # ~1/3 of physical VMEM for the double-buffered blocks; the rest is
        # headroom for in-kernel temporaries and compiler scratch.
        budget = max(8 << 20, min(48 << 20, vmem_bytes // 3))
        vmem_limit = int(min(vmem_bytes * 3 // 4, 100 << 20))

    in_bytes = jnp.dtype(in_dtype).itemsize
    out_bytes = jnp.dtype(out_dtype).itemsize
    per_img = (
        2 * 2 * C * H * W * in_bytes   # two inputs, double-buffered
        + 2 * H * W * out_bytes        # output, double-buffered
        + 8 * H * W * 4                # in-kernel f32 temporaries (diff, rolls, selects)
    )
    bt = max(1, min(N, budget // per_img))
    n_steps = -(-N // bt)
    if cores > 1:
        # Multi-TensorCore chip (v7x): keep >= `cores` grid steps when N allows
        # so the "parallel" batch axis can be sharded across cores.
        n_steps = max(n_steps, min(cores, N))
    bt = -(-N // n_steps)              # rebalance: near-equal blocks, minimal padding
    n_steps = -(-N // bt)
    return int(bt), int(n_steps), vmem_limit


def _make_edge_kernel(dog_np: np.ndarray, H: int, W: int, pad: int):
    """Returns a Pallas kernel body with the DoG taps baked in as constants."""
    K = dog_np.shape[0]
    taps = [[float(dog_np[i, j]) for j in range(K)] for i in range(K)]
    w_r, w_g, w_b = GRAY_W

    def kernel(x0_ref, x1_ref, out_ref):
        # x*_ref:  (bt, 3, H, W) in the inputs' native dtype (no wrapper upcast).
        # out_ref: (bt, H, W) (channel dim squeezed via BlockSpec None).

        # Grayscale difference, channel by channel, accumulated in f32.
        # (conv linearity: one DoG conv on the diff instead of two convs.)
        d = w_r * (x0_ref[:, 0].astype(jnp.float32) - x1_ref[:, 0].astype(jnp.float32))
        d = d + w_g * (x0_ref[:, 1].astype(jnp.float32) - x1_ref[:, 1].astype(jnp.float32))
        d = d + w_b * (x0_ref[:, 2].astype(jnp.float32) - x1_ref[:, 2].astype(jnp.float32))
        # d: (bt, H, W) f32

        shape = d.shape
        col = lax.broadcasted_iota(jnp.int32, shape, 2)   # lane (last-dim) index
        row = lax.broadcasted_iota(jnp.int32, shape, 1)   # sublane (row) index

        # Lane-direction (dx) neighbours of d with zero 'SAME' padding, built
        # once and reused across all row taps. pltpu.roll runs on the XLU slot;
        # the border zeroing is a cheap select — no padded scratch, no stores.
        lane = {}
        for kj in range(K):
            dx = kj - pad
            if dx == 0:
                lane[dx] = d
            else:
                rolled = pltpu.roll(d, (-dx) % W, axis=2)        # rolled[w] = d[(w+dx) % W]
                valid = jnp.logical_and(col + dx >= 0, col + dx < W)
                lane[dx] = jnp.where(valid, rolled, 0.0)

        # Per-row-offset partial sums, then one sublane roll + border mask each.
        e = None
        for ki in range(K):
            dy = ki - pad
            s = None
            for kj in range(K):
                term = taps[ki][kj] * lane[kj - pad]
                s = term if s is None else s + term
            if dy != 0:
                s = pltpu.roll(s, (-dy) % H, axis=1)             # s[h] <- s[(h+dy) % H]
                valid = jnp.logical_and(row + dy >= 0, row + dy < H)
                s = jnp.where(valid, s, 0.0)
            e = s if e is None else e + s

        out_ref[...] = (e * e).astype(out_ref.dtype)

    return kernel


@functools.partial(jax.jit, static_argnames=("size", "var", "var_delta"))
def edge_forward(in0, in1, *, size=3, var=1.0, var_delta=1.0):
    """Pallas implementation of Edge.forward (colorspace='Gray')."""
    N, C, H, W = in0.shape
    assert C == 3, "Edge expects RGB NCHW inputs"
    assert in1.shape == in0.shape
    pad = size // 2

    dog_np = _dog_kernel_np(size, float(var), float(var_delta))

    out_dtype = in0.dtype if jnp.issubdtype(in0.dtype, jnp.floating) else jnp.float32
    bt, n_steps, vmem_limit = _pick_tiling(N, C, H, W, in0.dtype, out_dtype)

    kernel = _make_edge_kernel(dog_np, H, W, pad)

    compiler_kwargs = dict(dimension_semantics=("parallel",))
    if vmem_limit is not None:
        compiler_kwargs["vmem_limit_bytes"] = vmem_limit

    return pl.pallas_call(
        kernel,
        out_shape=jax.ShapeDtypeStruct((N, 1, H, W), out_dtype),
        grid_spec=pltpu.PrefetchScalarGridSpec(
            num_scalar_prefetch=0,
            grid=(n_steps,),
            in_specs=[
                pl.BlockSpec((bt, 3, H, W), lambda b: (b, 0, 0, 0)),
                pl.BlockSpec((bt, 3, H, W), lambda b: (b, 0, 0, 0)),
            ],
            out_specs=pl.BlockSpec((bt, None, H, W), lambda b: (b, 0, 0, 0)),
        ),
        compiler_params=pltpu.CompilerParams(**compiler_kwargs),
    )(in0, in1)


def _reference_forward(in0, in1, *, size=3, var=1.0, var_delta=1.0):
    """Pure-JAX reference for correctness checking."""
    pad = size // 2
    dog = jnp.asarray(_dog_kernel_np(size, float(var), float(var_delta)))
    gw = jnp.asarray(GRAY_W, jnp.float32)

    def to_gray(x):
        return jnp.einsum("nchw,c->nhw", x.astype(jnp.float32), gw)[:, None]

    g0, g1 = to_gray(in0), to_gray(in1)
    rhs = dog[None, None]  # (1, 1, K, K)

    def conv(g):
        return lax.conv_general_dilated(
            g, rhs, window_strides=(1, 1),
            padding=((pad, pad), (pad, pad)),
            dimension_numbers=("NCHW", "OIHW", "NCHW"),
        )

    d = conv(g0) - conv(g1)
    return d * d


if __name__ == "__main__":
    key = jax.random.PRNGKey(0)
    k0, k1 = jax.random.split(key)
    # Small NCHW inputs in [-1, 1], mimicking normalized images.
    in0 = jax.random.uniform(k0, (2, 3, 16, 16), jnp.float32, minval=-1.0, maxval=1.0)
    in1 = jax.random.uniform(k1, (2, 3, 16, 16), jnp.float32, minval=-1.0, maxval=1.0)

    out = edge_forward(in0, in1, size=3, var=1.0, var_delta=1.0)
    out = jax.block_until_ready(out)

    ref = _reference_forward(in0, in1, size=3, var=1.0, var_delta=1.0)
    np.testing.assert_allclose(np.asarray(out), np.asarray(ref), rtol=1e-5, atol=1e-5)

    assert out.shape == (2, 1, 16, 16) and out.dtype == jnp.float32
    print("KERNEL_OK")
</pallas_src>

<mosaic_0001>
module attributes {stable_mosaic.version = 11 : i64} {
  func.func @kernel(%arg0: i32, %arg1: memref<2x3x16x16xf32, #tpu.memory_space<vmem>>, %arg2: memref<2x3x16x16xf32, #tpu.memory_space<vmem>>, %arg3: memref<2x1x16x16xf32, #tpu.memory_space<vmem>>) attributes {dimension_semantics = [#tpu.dimension_semantics<parallel>], iteration_bounds = array<i64: 1>, scalar_prefetch = 0 : i64, scratch_operands = 0 : i64, tpu.core_type = #tpu.core_type<tc>, window_params = [{transform_indices = @transform_0, window_bounds = array<i64: 2, 3, 16, 16>}, {transform_indices = @transform_1, window_bounds = array<i64: 2, 3, 16, 16>}, {transform_indices = @transform_2, window_bounds = array<i64: 2, 1, 16, 16>}]} {
    %c0 = arith.constant 0 : index
    %c0_0 = arith.constant 0 : index
    %c0_1 = arith.constant 0 : index
    %c0_2 = arith.constant 0 : index
    %0 = vector.load %arg1[%c0, %c0_0, %c0_1, %c0_2] : memref<2x3x16x16xf32, #tpu.memory_space<vmem>>, vector<2x1x16x16xf32>
    %1 = vector.shape_cast %0 : vector<2x1x16x16xf32> to vector<2x16x16xf32>
    %c0_3 = arith.constant 0 : index
    %c0_4 = arith.constant 0 : index
    %c0_5 = arith.constant 0 : index
    %c0_6 = arith.constant 0 : index
    %2 = vector.load %arg2[%c0_3, %c0_4, %c0_5, %c0_6] : memref<2x3x16x16xf32, #tpu.memory_space<vmem>>, vector<2x1x16x16xf32>
    %3 = vector.shape_cast %2 : vector<2x1x16x16xf32> to vector<2x16x16xf32>
    %4 = arith.subf %1, %3 : vector<2x16x16xf32>
    %cst = arith.constant 2.990000e-01 : f32
    %5 = vector.broadcast %cst : f32 to vector<2x16x16xf32>
    %6 = arith.mulf %5, %4 : vector<2x16x16xf32>
    %c0_7 = arith.constant 0 : index
    %c1 = arith.constant 1 : index
    %c0_8 = arith.constant 0 : index
    %c0_9 = arith.constant 0 : index
    %7 = vector.load %arg1[%c0_7, %c1, %c0_8, %c0_9] : memref<2x3x16x16xf32, #tpu.memory_space<vmem>>, vector<2x1x16x16xf32>
    %8 = vector.shape_cast %7 : vector<2x1x16x16xf32> to vector<2x16x16xf32>
    %c0_10 = arith.constant 0 : index
    %c1_11 = arith.constant 1 : index
    %c0_12 = arith.constant 0 : index
    %c0_13 = arith.constant 0 : index
    %9 = vector.load %arg2[%c0_10, %c1_11, %c0_12, %c0_13] : memref<2x3x16x16xf32, #tpu.memory_space<vmem>>, vector<2x1x16x16xf32>
    %10 = vector.shape_cast %9 : vector<2x1x16x16xf32> to vector<2x16x16xf32>
    %11 = arith.subf %8, %10 : vector<2x16x16xf32>
    %cst_14 = arith.constant 5.870000e-01 : f32
    %12 = vector.broadcast %cst_14 : f32 to vector<2x16x16xf32>
    %13 = arith.mulf %12, %11 : vector<2x16x16xf32>
    %14 = arith.addf %6, %13 : vector<2x16x16xf32>
    %c0_15 = arith.constant 0 : index
    %c2 = arith.constant 2 : index
    %c0_16 = arith.constant 0 : index
    %c0_17 = arith.constant 0 : index
    %15 = vector.load %arg1[%c0_15, %c2, %c0_16, %c0_17] : memref<2x3x16x16xf32, #tpu.memory_space<vmem>>, vector<2x1x16x16xf32>
    %16 = vector.shape_cast %15 : vector<2x1x16x16xf32> to vector<2x16x16xf32>
    %c0_18 = arith.constant 0 : index
    %c2_19 = arith.constant 2 : index
    %c0_20 = arith.constant 0 : index
    %c0_21 = arith.constant 0 : index
    %17 = vector.load %arg2[%c0_18, %c2_19, %c0_20, %c0_21] : memref<2x3x16x16xf32, #tpu.memory_space<vmem>>, vector<2x1x16x16xf32>
    %18 = vector.shape_cast %17 : vector<2x1x16x16xf32> to vector<2x16x16xf32>
    %19 = arith.subf %16, %18 : vector<2x16x16xf32>
    %cst_22 = arith.constant 1.140000e-01 : f32
    %20 = vector.broadcast %cst_22 : f32 to vector<2x16x16xf32>
    %21 = arith.mulf %20, %19 : vector<2x16x16xf32>
    %22 = arith.addf %14, %21 : vector<2x16x16xf32>
    %23 = tpu.iota {dimensions = array<i32: 2>} : vector<2x16x16xi32>
    %24 = tpu.iota {dimensions = array<i32: 1>} : vector<2x16x16xi32>
    %c1_i32 = arith.constant 1 : i32
    %25 = tpu.dynamic_rotate %22 by %c1_i32 dim 2 : vector<2x16x16xf32>, i32 -> vector<2x16x16xf32>
    %c-1_i32 = arith.constant -1 : i32
    %26 = vector.broadcast %c-1_i32 : i32 to vector<2x16x16xi32>
    %27 = arith.addi %23, %26 : vector<2x16x16xi32>
    %c0_i32 = arith.constant 0 : i32
    %28 = vector.broadcast %c0_i32 : i32 to vector<2x16x16xi32>
    %29 = arith.cmpi sge, %27, %28 : vector<2x16x16xi32>
    %c-1_i32_23 = arith.constant -1 : i32
    %30 = vector.broadcast %c-1_i32_23 : i32 to vector<2x16x16xi32>
    %31 = arith.addi %23, %30 : vector<2x16x16xi32>
    %c16_i32 = arith.constant 16 : i32
    %32 = vector.broadcast %c16_i32 : i32 to vector<2x16x16xi32>
    %33 = arith.cmpi slt, %31, %32 : vector<2x16x16xi32>
    %34 = arith.andi %29, %33 : vector<2x16x16xi1>
    %cst_24 = arith.constant 0.000000e+00 : f32
    %35 = vector.broadcast %cst_24 : f32 to vector<2x16x16xf32>
    %36 = arith.select %34, %25, %35 : vector<2x16x16xi1>, vector<2x16x16xf32>
    %c15_i32 = arith.constant 15 : i32
    %37 = tpu.dynamic_rotate %22 by %c15_i32 dim 2 : vector<2x16x16xf32>, i32 -> vector<2x16x16xf32>
    %c1_i32_25 = arith.constant 1 : i32
    %38 = vector.broadcast %c1_i32_25 : i32 to vector<2x16x16xi32>
    %39 = arith.addi %23, %38 : vector<2x16x16xi32>
    %c0_i32_26 = arith.constant 0 : i32
    %40 = vector.broadcast %c0_i32_26 : i32 to vector<2x16x16xi32>
    %41 = arith.cmpi sge, %39, %40 : vector<2x16x16xi32>
    %c1_i32_27 = arith.constant 1 : i32
    %42 = vector.broadcast %c1_i32_27 : i32 to vector<2x16x16xi32>
    %43 = arith.addi %23, %42 : vector<2x16x16xi32>
    %c16_i32_28 = arith.constant 16 : i32
    %44 = vector.broadcast %c16_i32_28 : i32 to vector<2x16x16xi32>
    %45 = arith.cmpi slt, %43, %44 : vector<2x16x16xi32>
    %46 = arith.andi %41, %45 : vector<2x16x16xi1>
    %cst_29 = arith.constant 0.000000e+00 : f32
    %47 = vector.broadcast %cst_29 : f32 to vector<2x16x16xf32>
    %48 = arith.select %46, %37, %47 : vector<2x16x16xi1>, vector<2x16x16xf32>
    %cst_30 = arith.constant -0.0176092871 : f32
    %49 = vector.broadcast %cst_30 : f32 to vector<2x16x16xf32>
    %50 = arith.mulf %49, %36 : vector<2x16x16xf32>
    %cst_31 = arith.constant 4.782850e-03 : f32
    %51 = vector.broadcast %cst_31 : f32 to vector<2x16x16xf32>
    %52 = arith.mulf %51, %22 : vector<2x16x16xf32>
    %53 = arith.addf %50, %52 : vector<2x16x16xf32>
    %cst_32 = arith.constant -0.0176092871 : f32
    %54 = vector.broadcast %cst_32 : f32 to vector<2x16x16xf32>
    %55 = arith.mulf %54, %48 : vector<2x16x16xf32>
    %56 = arith.addf %53, %55 : vector<2x16x16xf32>
    %c1_i32_33 = arith.constant 1 : i32
    %57 = tpu.dynamic_rotate %56 by %c1_i32_33 dim 1 : vector<2x16x16xf32>, i32 -> vector<2x16x16xf32>
    %c-1_i32_34 = arith.constant -1 : i32
    %58 = vector.broadcast %c-1_i32_34 : i32 to vector<2x16x16xi32>
    %59 = arith.addi %24, %58 : vector<2x16x16xi32>
    %c0_i32_35 = arith.constant 0 : i32
    %60 = vector.broadcast %c0_i32_35 : i32 to vector<2x16x16xi32>
    %61 = arith.cmpi sge, %59, %60 : vector<2x16x16xi32>
    %c-1_i32_36 = arith.constant -1 : i32
    %62 = vector.broadcast %c-1_i32_36 : i32 to vector<2x16x16xi32>
    %63 = arith.addi %24, %62 : vector<2x16x16xi32>
    %c16_i32_37 = arith.constant 16 : i32
    %64 = vector.broadcast %c16_i32_37 : i32 to vector<2x16x16xi32>
    %65 = arith.cmpi slt, %63, %64 : vector<2x16x16xi32>
    %66 = arith.andi %61, %65 : vector<2x16x16xi1>
    %cst_38 = arith.constant 0.000000e+00 : f32
    %67 = vector.broadcast %cst_38 : f32 to vector<2x16x16xf32>
    %68 = arith.select %66, %57, %67 : vector<2x16x16xi1>, vector<2x16x16xf32>
    %cst_39 = arith.constant 4.782850e-03 : f32
    %69 = vector.broadcast %cst_39 : f32 to vector<2x16x16xf32>
    %70 = arith.mulf %69, %36 : vector<2x16x16xf32>
    %cst_40 = arith.constant 0.0513057485 : f32
    %71 = vector.broadcast %cst_40 : f32 to vector<2x16x16xf32>
    %72 = arith.mulf %71, %22 : vector<2x16x16xf32>
    %73 = arith.addf %70, %72 : vector<2x16x16xf32>
    %cst_41 = arith.constant 4.782850e-03 : f32
    %74 = vector.broadcast %cst_41 : f32 to vector<2x16x16xf32>
    %75 = arith.mulf %74, %48 : vector<2x16x16xf32>
    %76 = arith.addf %73, %75 : vector<2x16x16xf32>
    %77 = arith.addf %68, %76 : vector<2x16x16xf32>
    %cst_42 = arith.constant -0.0176092871 : f32
    %78 = vector.broadcast %cst_42 : f32 to vector<2x16x16xf32>
    %79 = arith.mulf %78, %36 : vector<2x16x16xf32>
    %cst_43 = arith.constant 4.782850e-03 : f32
    %80 = vector.broadcast %cst_43 : f32 to vector<2x16x16xf32>
    %81 = arith.mulf %80, %22 : vector<2x16x16xf32>
    %82 = arith.addf %79, %81 : vector<2x16x16xf32>
    %cst_44 = arith.constant -0.0176092871 : f32
    %83 = vector.broadcast %cst_44 : f32 to vector<2x16x16xf32>
    %84 = arith.mulf %83, %48 : vector<2x16x16xf32>
    %85 = arith.addf %82, %84 : vector<2x16x16xf32>
    %c15_i32_45 = arith.constant 15 : i32
    %86 = tpu.dynamic_rotate %85 by %c15_i32_45 dim 1 : vector<2x16x16xf32>, i32 -> vector<2x16x16xf32>
    %c1_i32_46 = arith.constant 1 : i32
    %87 = vector.broadcast %c1_i32_46 : i32 to vector<2x16x16xi32>
    %88 = arith.addi %24, %87 : vector<2x16x16xi32>
    %c0_i32_47 = arith.constant 0 : i32
    %89 = vector.broadcast %c0_i32_47 : i32 to vector<2x16x16xi32>
    %90 = arith.cmpi sge, %88, %89 : vector<2x16x16xi32>
    %c1_i32_48 = arith.constant 1 : i32
    %91 = vector.broadcast %c1_i32_48 : i32 to vector<2x16x16xi32>
    %92 = arith.addi %24, %91 : vector<2x16x16xi32>
    %c16_i32_49 = arith.constant 16 : i32
    %93 = vector.broadcast %c16_i32_49 : i32 to vector<2x16x16xi32>
    %94 = arith.cmpi slt, %92, %93 : vector<2x16x16xi32>
    %95 = arith.andi %90, %94 : vector<2x16x16xi1>
    %cst_50 = arith.constant 0.000000e+00 : f32
    %96 = vector.broadcast %cst_50 : f32 to vector<2x16x16xf32>
    %97 = arith.select %95, %86, %96 : vector<2x16x16xi1>, vector<2x16x16xf32>
    %98 = arith.addf %77, %97 : vector<2x16x16xf32>
    %99 = arith.mulf %98, %98 : vector<2x16x16xf32>
    %c0_51 = arith.constant 0 : index
    %c0_52 = arith.constant 0 : index
    %c0_53 = arith.constant 0 : index
    %c0_54 = arith.constant 0 : index
    %100 = vector.load %arg3[%c0_51, %c0_52, %c0_53, %c0_54] : memref<2x1x16x16xf32, #tpu.memory_space<vmem>>, vector<2x1x16x16xf32>
    %101 = vector.shape_cast %100 : vector<2x1x16x16xf32> to vector<2x16x16xf32>
    %102 = vector.shape_cast %99 : vector<2x16x16xf32> to vector<2x1x16x16xf32>
    tpu.vector_store %arg3[%c0_51, %c0_52, %c0_53, %c0_54], %102 {strides = array<i32>} : memref<2x1x16x16xf32, #tpu.memory_space<vmem>>, vector<2x1x16x16xf32>,
    return
  }
  func.func @transform_0(%arg0: i32) -> (i32, i32, i32, i32) {
    %c0_i32 = arith.constant 0 : i32
    %c0_i32_0 = arith.constant 0 : i32
    %c0_i32_1 = arith.constant 0 : i32
    %c0_i32_2 = arith.constant 0 : i32
    return %arg0, %c0_i32, %c0_i32_0, %c0_i32_1 : i32, i32, i32, i32
  }
  func.func @transform_1(%arg0: i32) -> (i32, i32, i32, i32) {
    %c0_i32 = arith.constant 0 : i32
    %c0_i32_0 = arith.constant 0 : i32
    %c0_i32_1 = arith.constant 0 : i32
    %c0_i32_2 = arith.constant 0 : i32
    return %arg0, %c0_i32, %c0_i32_0, %c0_i32_1 : i32, i32, i32, i32
  }
  func.func @transform_2(%arg0: i32) -> (i32, i32, i32, i32) {
    %c0_i32 = arith.constant 0 : i32
    %c0_i32_0 = arith.constant 0 : i32
    %c0_i32_1 = arith.constant 0 : i32
    %c0_i32_2 = arith.constant 0 : i32
    return %arg0, %c0_i32, %c0_i32_0, %c0_i32_1 : i32, i32, i32, i32
  }
}

</mosaic_0001>

<llo_original>
// kernel: edge_forward.1
$region0: #{edge_forward.1}
  #allocation0 [shape = 'u32[]', space=smem, size = 0x4, offset = 0x4, fixed_abs, tag = 'smem constant byte address 0x4 - core index']
  #allocation1 [shape = 'u32[72,128]{1,0:T(1,128)}', space=vmem, size = 0x9000, scoped, tag = 'internal scratch']
  %s0 = inlined_call_operand.hbm [shape: f32[2,3,16,16], index: 0, kind: input, shape index: {}]
  %s1 = inlined_call_operand.hbm [shape: f32[2,3,16,16], index: 1, kind: input, shape index: {}]
  %s2 = inlined_call_operand.hbm [shape: f32[2,1,16,16], index: 2, kind: output, shape index: {}]
  %s3 = sld [smem:[#allocation0]]
  $region26: #{edge_forward.1} parent=0
    _
  %s5 = ssub.s32 1, %s3
  %s6 = scalar_select 0, %s5, %s3
  $region1: #{edge_forward.1} parent=0
    #allocation2 [shape = 'u8[49152]{0}', space=vmem, size = 0xc000, scoped, tag = 'input window, operand 0, single buffered']
    #allocation3 [shape = 's32[1]{0}', space=sflag, size = 0x4, scoped, tag = 'scoped memory for edge_forward.1']
    #allocation4 [shape = 's32[1]{0}', space=sflag, size = 0x4, scoped, tag = 'scoped memory for edge_forward.1']
    #allocation5 [shape = 'u8[49152]{0}', space=vmem, size = 0xc000, scoped, tag = 'input window, operand 1, single buffered']
    #allocation6 [shape = 's32[1]{0}', space=sflag, size = 0x4, scoped, tag = 'scoped memory for edge_forward.1']
    #allocation7 [shape = 'u8[16384]{0}', space=vmem, size = 0x4000, scoped, tag = 'output window, operand 0, single buffered']
    %7 = vsyncpa [#allocation3], 0
    %8 = vsyncpa [#allocation6], 0
    %9 = vsyncpa [#allocation4], 0
    // Predicated region
    $region2: #{edge_forward.1} parent=1 // pred_check
      _
    $region3: #{edge_forward.1} parent=1 // pred_check_branch
      %11 = sbr.rel (0) target = $region5
    $region4: #{edge_forward.1} parent=1 // pred_region
      %13 = vsyncadd [#allocation3], 0
      %s14 = sshll.u32 %s0, 4
      %s15 = int_to_ptr.hbm [resolvable:$true] %s14
      %s16 = sshll.u32 [#allocation2], 4
      %s17 = int_to_ptr.vmem [resolvable:$true] %s16
      %22 = dma.hbm_to_vmem [thread:$0]  %s15, 1536, %s17, [#allocation3], 128, 128, 8
    $region5: #{edge_forward.1} parent=1 // pred_fallthru
      _
    // Predicated region
    $region6: #{edge_forward.1} parent=1 // pred_check
      _
    $region7: #{edge_forward.1} parent=1 // pred_check_branch
      %24 = sbr.rel (0) target = $region9
    $region8: #{edge_forward.1} parent=1 // pred_region
      %26 = vsyncadd [#allocation6], 0
      %s27 = sshll.u32 %s1, 4
      %s28 = int_to_ptr.hbm [resolvable:$true] %s27
      %s29 = sshll.u32 [#allocation5], 4
      %s30 = int_to_ptr.vmem [resolvable:$true] %s29
      %35 = dma.hbm_to_vmem [thread:$0]  %s28, 1536, %s30, [#allocation6], 128, 128, 8
    $region9: #{edge_forward.1} parent=1 // pred_fallthru
      _
    // Predicated region
    $region10: #{edge_forward.1} parent=1 // pred_check
      _
    $region11: #{edge_forward.1} parent=1 // pred_check_branch
      %37 = sbr.rel (0) target = $region13
    $region12: #{edge_forward.1} parent=1 // pred_region
      %39 = dma.done [#allocation3], 1536
    $region13: #{edge_forward.1} parent=1 // pred_fallthru
      _
    // Predicated region
    $region14: #{edge_forward.1} parent=1 // pred_check
      _
    $region15: #{edge_forward.1} parent=1 // pred_check_branch
      %41 = sbr.rel (0) target = $region17
    $region16: #{edge_forward.1} parent=1 // pred_region
      %43 = dma.done [#allocation6], 1536
    $region17: #{edge_forward.1} parent=1 // pred_fallthru
      _
    %v44 = vld [vmem:[#allocation2] sm:$0xff]
    %v45 = vld [vmem:[#allocation2 + $0x8] sm:$0xff]
    %v46 = vld [vmem:[#allocation2 + $0x30] sm:$0xff]
    %v47 = vld [vmem:[#allocation2 + $0x38] sm:$0xff]
    %v48 = vld [vmem:[#allocation5] sm:$0xff]
    %v49 = vld [vmem:[#allocation5 + $0x8] sm:$0xff]
    %v50 = vld [vmem:[#allocation5 + $0x30] sm:$0xff]
    %v51 = vld [vmem:[#allocation5 + $0x38] sm:$0xff]
    %v52 = vsub.f32 %v44, %v48
    %v53 = vsub.f32 %v45, %v49
    %v54 = vsub.f32 %v46, %v50
    %v55 = vsub.f32 %v47, %v51
    %v56 = vmul.f32 %v52, 0.299
    %v57 = vmul.f32 %v53, 0.299
    %v58 = vmul.f32 %v54, 0.299
    %v59 = vmul.f32 %v55, 0.299
    %s60 = scalar_lea.vmem [#allocation2], 16
    %v61 = vld [vmem:[%s60] sm:$0xff]
    %v62 = vld [vmem:[%s60 + $0x8] sm:$0xff]
    %v63 = vld [vmem:[%s60 + $0x30] sm:$0xff]
    %v64 = vld [vmem:[%s60 + $0x38] sm:$0xff]
    %s65 = scalar_lea.vmem [#allocation5], 16
    %v66 = vld [vmem:[%s65] sm:$0xff]
    %v67 = vld [vmem:[%s65 + $0x8] sm:$0xff]
    %v68 = vld [vmem:[%s65 + $0x30] sm:$0xff]
    %v69 = vld [vmem:[%s65 + $0x38] sm:$0xff]
    %v70 = vsub.f32 %v61, %v66
    %v71 = vsub.f32 %v62, %v67
    %v72 = vsub.f32 %v63, %v68
    %v73 = vsub.f32 %v64, %v69
    %v74 = vmul.f32 %v70, 0.587
    %v75 = vmul.f32 %v71, 0.587
    %v76 = vmul.f32 %v72, 0.587
    %v77 = vmul.f32 %v73, 0.587
    %v78 = vadd.f32 %v56, %v74
    %v79 = vadd.f32 %v57, %v75
    %v80 = vadd.f32 %v58, %v76
    %v81 = vadd.f32 %v59, %v77
    %s82 = scalar_lea.vmem [#allocation2], 32
    %v83 = vld [vmem:[%s82] sm:$0xff]
    %v84 = vld [vmem:[%s82 + $0x8] sm:$0xff]
    %v85 = vld [vmem:[%s82 + $0x30] sm:$0xff]
    %v86 = vld [vmem:[%s82 + $0x38] sm:$0xff]
    %s87 = scalar_lea.vmem [#allocation5], 32
    %v88 = vld [vmem:[%s87] sm:$0xff]
    %v89 = vld [vmem:[%s87 + $0x8] sm:$0xff]
    %v90 = vld [vmem:[%s87 + $0x30] sm:$0xff]
    %v91 = vld [vmem:[%s87 + $0x38] sm:$0xff]
    %v92 = vsub.f32 %v83, %v88
    %v93 = vsub.f32 %v84, %v89
    %v94 = vsub.f32 %v85, %v90
    %v95 = vsub.f32 %v86, %v91
    %v96 = vmul.f32 %v92, 0.114
    %v97 = vmul.f32 %v93, 0.114
    %v98 = vmul.f32 %v94, 0.114
    %v99 = vmul.f32 %v95, 0.114
    %v100 = vadd.f32 %v78, %v96
    %v101 = vadd.f32 %v79, %v97
    %v102 = vadd.f32 %v80, %v98
    %v103 = vadd.f32 %v81, %v99
    %v104 = vlaneseq
    %v105 = vand.u32 %v104, 127
    %v106 = vlaneseq
    %v107 = vshrl.u32 %v106, 7
    %v108 = vadd.s32 %v107, 8
    %vm109 = vcmask 1047680
    %110 = vrot.lane.b32.xlu0 %v100, 16
    %v111 = vpop.permute.xlu0 %110
    %v112 = vsel %vm109, %v111, %v100
    %113 = vrot.lane.b32.xlu0 %v101, 16
    %v114 = vpop.permute.xlu0 %113
    %v115 = vsel %vm109, %v114, %v101
    %116 = vrot.lane.b32.xlu0 %v102, 16
    %v117 = vpop.permute.xlu0 %116
    %v118 = vsel %vm109, %v117, %v102
    %119 = vrot.lane.b32.xlu0 %v103, 16
    %v120 = vpop.permute.xlu0 %119
    %v121 = vsel %vm109, %v120, %v103
    %122 = vrot.lane.b32.xlu0 %v112, 16
    %v123 = vpop.permute.xlu0 %122
    %124 = vrot.lane.b32.xlu0 %v115, 16
    %v125 = vpop.permute.xlu0 %124
    %126 = vrot.lane.b32.xlu0 %v118, 16
    %v127 = vpop.permute.xlu0 %126
    %128 = vrot.lane.b32.xlu0 %v121, 16
    %v129 = vpop.permute.xlu0 %128
    %v130 = vsel %vm109, %v123, %v100
    %v131 = vsel %vm109, %v125, %v101
    %v132 = vsel %vm109, %v127, %v102
    %v133 = vsel %vm109, %v129, %v103
    %v134 = vadd.s32 %v105, 4294967295
    %vm135 = vcmp.ge.s32.totalorder %v134, 0
    %vm136 = vcmp.lt.s32.totalorder %v134, 16
    %vm137 = vmand %vm135, %vm136
    %142 = vrot.lane.b32.xlu0 %v130, 113
    %v143 = vpop.permute.xlu0 %142
    %144 = vrot.lane.b32.xlu0 %v131, 113
    %v145 = vpop.permute.xlu0 %144
    %146 = vrot.lane.b32.xlu0 %v132, 113
    %v147 = vpop.permute.xlu0 %146
    %148 = vrot.lane.b32.xlu0 %v133, 113
    %v149 = vpop.permute.xlu0 %148
    %v154 = vsel %vm137, %v143, 0.0
    %v155 = vsel %vm137, %v145, 0.0
    %v156 = vsel %vm137, %v147, 0.0
    %v157 = vsel %vm137, %v149, 0.0
    %v158 = vadd.s32 %v105, 1
    %vm159 = vcmp.ge.s32.totalorder %v158, 0
    %vm160 = vcmp.lt.s32.totalorder %v158, 16
    %vm161 = vmand %vm159, %vm160
    %162 = vrot.lane.b32.xlu0 %v130, 127
    %v163 = vpop.permute.xlu0 %162
    %164 = vrot.lane.b32.xlu0 %v131, 127
    %v165 = vpop.permute.xlu0 %164
    %166 = vrot.lane.b32.xlu0 %v132, 127
    %v167 = vpop.permute.xlu0 %166
    %168 = vrot.lane.b32.xlu0 %v133, 127
    %v169 = vpop.permute.xlu0 %168
    %v174 = vsel %vm161, %v163, 0.0
    %v175 = vsel %vm161, %v165, 0.0
    %v176 = vsel %vm161, %v167, 0.0
    %v177 = vsel %vm161, %v169, 0.0
    %v178 = vmul.f32 %v154, -0.017609287
    %v179 = vmul.f32 %v155, -0.017609287
    %v180 = vmul.f32 %v156, -0.017609287
    %v181 = vmul.f32 %v157, -0.017609287
    %v182 = vmul.f32 %v100, 0.00478285
    %v183 = vmul.f32 %v101, 0.00478285
    %v184 = vmul.f32 %v102, 0.00478285
    %v185 = vmul.f32 %v103, 0.00478285
    %v186 = vadd.f32 %v178, %v182
    %v187 = vadd.f32 %v179, %v183
    %v188 = vadd.f32 %v180, %v184
    %v189 = vadd.f32 %v181, %v185
    %v190 = vmul.f32 %v174, -0.017609287
    %v191 = vmul.f32 %v175, -0.017609287
    %v192 = vmul.f32 %v176, -0.017609287
    %v193 = vmul.f32 %v177, -0.017609287
    %v194 = vadd.f32 %v186, %v190
    %v195 = vadd.f32 %v187, %v191
    %v196 = vadd.f32 %v188, %v192
    %v197 = vadd.f32 %v189, %v193
    %v198 = vrot.slane %v194, 7
    %v199 = vrot.slane %v196, 7
    %v200 = vrot.slane %v195, 7
    %v201 = vrot.slane %v197, 7
    %vm202 = vcmp.lt.s32.totalorder %v107, 1
    %v203 = vsel %vm202, %v198, %v200
    %v204 = vsel %vm202, %v199, %v201
    %v205 = vsel %vm202, %v200, %v198
    %v206 = vsel %vm202, %v201, %v199
    %v207 = vadd.s32 %v107, 4294967295
    %v208 = vadd.s32 %v108, 4294967295
    %vm209 = vcmp.ge.s32.totalorder %v207, 0
    %vm210 = vcmp.ge.s32.totalorder %v208, 0
    %vm211 = vcmp.lt.s32.totalorder %v207, 16
    %vm212 = vcmp.lt.s32.totalorder %v208, 16
    %vm213 = vmand %vm209, %vm211
    %vm214 = vmand %vm210, %vm212
    %v215 = vsel %vm213, %v205, 0.0
    %v216 = vsel %vm214, %v203, 0.0
    %v217 = vsel %vm213, %v206, 0.0
    %v218 = vsel %vm214, %v204, 0.0
    %v219 = vmul.f32 %v154, 0.00478285
    %v220 = vmul.f32 %v155, 0.00478285
    %v221 = vmul.f32 %v156, 0.00478285
    %v222 = vmul.f32 %v157, 0.00478285
    %v223 = vmul.f32 %v100, 0.05130575
    %v224 = vmul.f32 %v101, 0.05130575
    %v225 = vmul.f32 %v102, 0.05130575
    %v226 = vmul.f32 %v103, 0.05130575
    %v227 = vadd.f32 %v219, %v223
    %v228 = vadd.f32 %v220, %v224
    %v229 = vadd.f32 %v221, %v225
    %v230 = vadd.f32 %v222, %v226
    %v231 = vmul.f32 %v174, 0.00478285
    %v232 = vmul.f32 %v175, 0.00478285
    %v233 = vmul.f32 %v176, 0.00478285
    %v234 = vmul.f32 %v177, 0.00478285
    %v235 = vadd.f32 %v227, %v231
    %v236 = vadd.f32 %v228, %v232
    %v237 = vadd.f32 %v229, %v233
    %v238 = vadd.f32 %v230, %v234
    %v239 = vadd.f32 %v215, %v235
    %v240 = vadd.f32 %v216, %v236
    %v241 = vadd.f32 %v217, %v237
    %v242 = vadd.f32 %v218, %v238
    %v243 = vrot.slane %v194, 1
    %v244 = vrot.slane %v196, 1
    %v245 = vrot.slane %v195, 1
    %v246 = vrot.slane %v197, 1
    %vm247 = vcmp.lt.s32.totalorder %v107, 7
    %v248 = vsel %vm247, %v243, %v245
    %v249 = vsel %vm247, %v244, %v246
    %v250 = vsel %vm247, %v245, %v243
    %v251 = vsel %vm247, %v246, %v244
    %v252 = vadd.s32 %v107, 1
    %v253 = vadd.s32 %v108, 1
    %vm254 = vcmp.ge.s32.totalorder %v252, 0
    %vm255 = vcmp.ge.s32.totalorder %v253, 0
    %vm256 = vcmp.lt.s32.totalorder %v252, 16
    %vm257 = vcmp.lt.s32.totalorder %v253, 16
    %vm258 = vmand %vm254, %vm256
    %vm259 = vmand %vm255, %vm257
    %v260 = vsel %vm258, %v248, 0.0
    %v261 = vsel %vm259, %v250, 0.0
    %v262 = vsel %vm258, %v249, 0.0
    %v263 = vsel %vm259, %v251, 0.0
    %v264 = vadd.f32 %v239, %v260
    %v265 = vadd.f32 %v240, %v261
    %v266 = vadd.f32 %v241, %v262
    %v267 = vadd.f32 %v242, %v263
    %v268 = vmul.f32 %v264, %v264
    %v269 = vmul.f32 %v265, %v265
    %v270 = vmul.f32 %v266, %v266
    %v271 = vmul.f32 %v267, %v267
    %vm272 = vcmask 130048
    %273 = vst.msk [vmem:[#allocation7] sm:$0xff] %vm272, %v268
    %274 = vst.msk [vmem:[#allocation7 + $0x8] sm:$0xff] %vm272, %v269
    %275 = vst.msk [vmem:[#allocation7 + $0x10] sm:$0xff] %vm272, %v270
    %276 = vst.msk [vmem:[#allocation7 + $0x18] sm:$0xff] %vm272, %v271
    // Predicated region
    $region18: #{edge_forward.1} parent=1 // pred_check
      _
    $region19: #{edge_forward.1} parent=1 // pred_check_branch
      %278 = sbr.rel (0) target = $region21
    $region20: #{edge_forward.1} parent=1 // pred_region
      %280 = vsyncadd [#allocation4], 0
      %s281 = sshll.u32 [#allocation7], 4
      %s282 = int_to_ptr.vmem [resolvable:$true] %s281
      %s283 = sshll.u32 %s2, 4
      %s284 = int_to_ptr.hbm [resolvable:$true] %s283
      %289 = dma.vmem_to_hbm [thread:$0]  %s282, 512, %s284, [#allocation4], 128, 128, 8
    $region21: #{edge_forward.1} parent=1 // pred_fallthru
      _
    // Predicated region
    $region22: #{edge_forward.1} parent=1 // pred_check
      _
    $region23: #{edge_forward.1} parent=1 // pred_check_branch
      %291 = sbr.rel (0) target = $region25
    $region24: #{edge_forward.1} parent=1 // pred_region
      %293 = dma.done [#allocation4], 512
    $region25: #{edge_forward.1} parent=1 // pred_fallthru
      _
    %294 = vsyncpa [#allocation3], 1
    %295 = vsyncpa [#allocation6], 1
    %296 = vsyncpa [#allocation4], 1

</llo_original>
